<compile_context>
chip_gen: v6e
topology: v6e:2x2x1
jax: 0.10.0
libtpu: 0.0.40
codegen_flags: <defaults>
</compile_context>

<pallas_src>
import math
import functools

import jax
import jax.numpy as jnp
from jax import lax
from jax.experimental import pallas as pl
from jax.experimental.pallas import tpu as pltpu

HIDDEN = 512
LANE = 128


def _round_up(n, m):
    return ((n + m - 1) // m) * m


def _fc_block_kernel(x_ref, w1_ref, b1_ref, w2_ref, b2_ref, o_ref):
    # x_ref : (bm, F_in_p)   bf16    w1_ref: (F_in_p, 512)   bf16   b1_ref: (1, 512)     f32
    # w2_ref: (512, F_out_p) bf16    b2_ref: (1, F_out_p)    f32    o_ref : (bm, F_out_p) f32
    x = x_ref[...]

    # Linear 1 (MXU: bf16 operands, f32 accumulation), bias add in f32.
    h = jnp.dot(x, w1_ref[...], preferred_element_type=jnp.float32) + b1_ref[...]

    # Exact GELU (PyTorch nn.GELU() default, erf-based), in f32.
    inv_sqrt2 = jnp.float32(1.0 / math.sqrt(2.0))
    h = 0.5 * h * (1.0 + lax.erf(h * inv_sqrt2))

    # Dropout(p=0.1) is identity at inference time.
    # TODO(synk): training-mode dropout (pltpu.prng_random_bits mask) not emitted.

    # Linear 2 (cast activations to bf16 for the MXU, accumulate in f32).
    y = jnp.dot(h.astype(jnp.bfloat16), w2_ref[...],
                preferred_element_type=jnp.float32) + b2_ref[...]
    o_ref[...] = y.astype(o_ref.dtype)


@functools.partial(jax.jit, static_argnames=("bm",))
def _fc_block_forward_impl(x, w1_t, b1, w2_t, b2, *, bm):
    B, f_in = x.shape
    f_out = w2_t.shape[1]

    # Lane-dense padding: features -> multiples of 128, batch -> multiple of bm.
    f_in_p = _round_up(f_in, LANE)
    f_out_p = _round_up(f_out, LANE)
    b_p = _round_up(B, bm)

    x_p = jnp.pad(x, ((0, b_p - B), (0, f_in_p - f_in))).astype(jnp.bfloat16)
    w1_p = jnp.pad(w1_t, ((0, f_in_p - f_in), (0, 0))).astype(jnp.bfloat16)
    w2_p = jnp.pad(w2_t, ((0, 0), (0, f_out_p - f_out))).astype(jnp.bfloat16)
    b1_p = b1.astype(jnp.float32)
    b2_p = jnp.pad(b2, ((0, 0), (0, f_out_p - f_out))).astype(jnp.float32)

    grid = (b_p // bm,)
    out = pl.pallas_call(
        _fc_block_kernel,
        out_shape=jax.ShapeDtypeStruct((b_p, f_out_p), jnp.float32),
        grid_spec=pltpu.PrefetchScalarGridSpec(
            num_scalar_prefetch=0,
            grid=grid,
            in_specs=[
                pl.BlockSpec((bm, f_in_p), lambda i: (i, 0)),        # x tile
                pl.BlockSpec((f_in_p, HIDDEN), lambda i: (0, 0)),    # w1 (resident)
                pl.BlockSpec((1, HIDDEN), lambda i: (0, 0)),         # b1 (resident)
                pl.BlockSpec((HIDDEN, f_out_p), lambda i: (0, 0)),   # w2 (resident)
                pl.BlockSpec((1, f_out_p), lambda i: (0, 0)),        # b2 (resident)
            ],
            out_specs=pl.BlockSpec((bm, f_out_p), lambda i: (i, 0)),
        ),
        compiler_params=pltpu.CompilerParams(
            dimension_semantics=("parallel",),
            vmem_limit_bytes=32 * 1024 * 1024,
        ),
    )(x_p, w1_p, b1_p, w2_p, b2_p)

    return out[:B, :f_out]


def fc_block_forward(x, w1_t, b1, w2_t, b2, *, bm=256):
    """x: (B, F_in) f32; w1_t: (F_in, 512); b1: (1, 512);
       w2_t: (512, F_out); b2: (1, F_out).  Returns (B, F_out) f32."""
    # bm: multiple of 128, but never larger than the (128-padded) batch.
    bm = max(LANE, min(_round_up(bm, LANE), _round_up(x.shape[0], LANE)))
    return _fc_block_forward_impl(x, w1_t, b1, w2_t, b2, bm=bm)


def weight_norm_effective(v, g):
    """PyTorch weight_norm (dim=0): w[i, :] = g[i] * v[i, :] / ||v[i, :]||_2."""
    norm = jnp.sqrt(jnp.sum(v * v, axis=1, keepdims=True))
    return g[:, None] * v / norm


def init_params(key, in_features, out_features):
    k = jax.random.split(key, 6)
    # Linear1: v (512, in), g (512,), b (512,)
    bound1 = 1.0 / math.sqrt(in_features)
    v1 = jax.random.uniform(k[0], (HIDDEN, in_features), jnp.float32, -bound1, bound1)
    g1 = jax.random.uniform(k[1], (HIDDEN,), jnp.float32, 0.5, 1.5)
    b1 = jax.random.uniform(k[2], (HIDDEN,), jnp.float32, -bound1, bound1)
    # Linear2: v (out, 512), g (out,), b (out,)
    bound2 = 1.0 / math.sqrt(HIDDEN)
    v2 = jax.random.uniform(k[3], (out_features, HIDDEN), jnp.float32, -bound2, bound2)
    g2 = jax.random.uniform(k[4], (out_features,), jnp.float32, 0.5, 1.5)
    b2 = jax.random.uniform(k[5], (out_features,), jnp.float32, -bound2, bound2)

    w1 = weight_norm_effective(v1, g1)          # (512, in)
    w2 = weight_norm_effective(v2, g2)          # (out, 512)
    # Pre-transpose to the kernel's (in, out) layout.
    return w1.T, b1[None, :], w2.T, b2[None, :]


def reference_forward(x, w1_t, b1, w2_t, b2):
    # Mirror the kernel's bf16-operand / f32-accumulate numerics.
    h = jnp.dot(x.astype(jnp.bfloat16), w1_t.astype(jnp.bfloat16),
                preferred_element_type=jnp.float32) + b1
    h = 0.5 * h * (1.0 + lax.erf(h / jnp.sqrt(2.0)))
    return jnp.dot(h.astype(jnp.bfloat16), w2_t.astype(jnp.bfloat16),
                   preferred_element_type=jnp.float32) + b2


if __name__ == "__main__":
    key = jax.random.PRNGKey(0)
    kx, kp = jax.random.split(key)

    # Small shapes consistent with the module; B=200 exercises batch padding,
    # bm=128 gives a 2-step parallel grid.
    B, in_features, out_features = 200, 16, 32
    x = jax.random.normal(kx, (B, in_features), jnp.float32)
    w1_t, b1, w2_t, b2 = init_params(kp, in_features, out_features)

    y = fc_block_forward(x, w1_t, b1, w2_t, b2, bm=128)
    y = jax.block_until_ready(y)

    y_ref = reference_forward(x, w1_t, b1, w2_t, b2)
    assert y.shape == (B, out_features)
    assert bool(jnp.all(jnp.isfinite(y)))
    assert jnp.allclose(y, y_ref, atol=2e-2, rtol=2e-2), "mismatch vs reference"

    print("KERNEL_OK")
</pallas_src>

<mosaic_0001>
module attributes {stable_mosaic.version = 11 : i64} {
  func.func @_fc_block_kernel(%arg0: i32, %arg1: memref<128x128xbf16, #tpu.memory_space<vmem>>, %arg2: memref<128x512xbf16, #tpu.memory_space<vmem>>, %arg3: memref<1x512xf32, #tpu.memory_space<vmem>>, %arg4: memref<512x128xbf16, #tpu.memory_space<vmem>>, %arg5: memref<1x128xf32, #tpu.memory_space<vmem>>, %arg6: memref<128x128xf32, #tpu.memory_space<vmem>>) attributes {dimension_semantics = [#tpu.dimension_semantics<parallel>], iteration_bounds = array<i64: 2>, scalar_prefetch = 0 : i64, scratch_operands = 0 : i64, tpu.core_type = #tpu.core_type<tc>, window_params = [{transform_indices = @transform_0, window_bounds = array<i64: 128, 128>}, {pipeline_mode = #tpu.pipeline_mode<synchronous>, transform_indices = @transform_1, window_bounds = array<i64: 128, 512>}, {pipeline_mode = #tpu.pipeline_mode<synchronous>, transform_indices = @transform_2, window_bounds = array<i64: 1, 512>}, {pipeline_mode = #tpu.pipeline_mode<synchronous>, transform_indices = @transform_3, window_bounds = array<i64: 512, 128>}, {pipeline_mode = #tpu.pipeline_mode<synchronous>, transform_indices = @transform_4, window_bounds = array<i64: 1, 128>}, {transform_indices = @transform_5, window_bounds = array<i64: 128, 128>}]} {
    %c0 = arith.constant 0 : index
    %c0_0 = arith.constant 0 : index
    %0 = vector.load %arg1[%c0, %c0_0] : memref<128x128xbf16, #tpu.memory_space<vmem>>, vector<128x128xbf16>
    %c0_1 = arith.constant 0 : index
    %c0_2 = arith.constant 0 : index
    %1 = vector.load %arg2[%c0_1, %c0_2] : memref<128x512xbf16, #tpu.memory_space<vmem>>, vector<128x512xbf16>
    %cst = arith.constant dense<0.000000e+00> : vector<128x512xf32>
    %2 = tpu.matmul %0, %1, %cst {dimension_numbers = #tpu.dot_dimension_numbers<[1], [0], [0], [1], [0, 0, 1, 1], [], []>} : vector<128x128xbf16>, vector<128x512xbf16>, vector<128x512xf32> -> vector<128x512xf32>
    %c0_3 = arith.constant 0 : index
    %c0_4 = arith.constant 0 : index
    %3 = vector.load %arg3[%c0_3, %c0_4] : memref<1x512xf32, #tpu.memory_space<vmem>>, vector<1x512xf32>
    %4 = vector.broadcast %3 : vector<1x512xf32> to vector<128x512xf32>
    %5 = arith.addf %2, %4 : vector<128x512xf32>
    %cst_5 = arith.constant 5.000000e-01 : f32
    %6 = vector.broadcast %cst_5 : f32 to vector<128x512xf32>
    %7 = arith.mulf %6, %5 : vector<128x512xf32>
    %cst_6 = arith.constant 0.707106769 : f32
    %8 = vector.broadcast %cst_6 : f32 to vector<128x512xf32>
    %9 = arith.mulf %5, %8 : vector<128x512xf32>
    %10 = math.erf %9 : vector<128x512xf32>
    %cst_7 = arith.constant 1.000000e+00 : f32
    %11 = vector.broadcast %cst_7 : f32 to vector<128x512xf32>
    %12 = arith.addf %11, %10 : vector<128x512xf32>
    %13 = arith.mulf %7, %12 : vector<128x512xf32>
    %14 = arith.truncf %13 : vector<128x512xf32> to vector<128x512xbf16>
    %c0_8 = arith.constant 0 : index
    %c0_9 = arith.constant 0 : index
    %15 = vector.load %arg4[%c0_8, %c0_9] : memref<512x128xbf16, #tpu.memory_space<vmem>>, vector<512x128xbf16>
    %cst_10 = arith.constant dense<0.000000e+00> : vector<128x128xf32>
    %16 = tpu.matmul %14, %15, %cst_10 {dimension_numbers = #tpu.dot_dimension_numbers<[1], [0], [0], [1], [0, 0, 1, 1], [], []>} : vector<128x512xbf16>, vector<512x128xbf16>, vector<128x128xf32> -> vector<128x128xf32>
    %c0_11 = arith.constant 0 : index
    %c0_12 = arith.constant 0 : index
    %17 = vector.load %arg5[%c0_11, %c0_12] : memref<1x128xf32, #tpu.memory_space<vmem>>, vector<1x128xf32>
    %18 = vector.broadcast %17 : vector<1x128xf32> to vector<128x128xf32>
    %19 = arith.addf %16, %18 : vector<128x128xf32>
    %c0_13 = arith.constant 0 : index
    %c0_14 = arith.constant 0 : index
    %20 = vector.load %arg6[%c0_13, %c0_14] : memref<128x128xf32, #tpu.memory_space<vmem>>, vector<128x128xf32>
    tpu.vector_store %arg6[%c0_13, %c0_14], %19 {strides = array<i32>} : memref<128x128xf32, #tpu.memory_space<vmem>>, vector<128x128xf32>,
    return
  }
  func.func @transform_0(%arg0: i32) -> (i32, i32) {
    %c0_i32 = arith.constant 0 : i32
    %c0_i32_0 = arith.constant 0 : i32
    return %arg0, %c0_i32 : i32, i32
  }
  func.func @transform_1(%arg0: i32) -> (i32, i32) {
    %c0_i32 = arith.constant 0 : i32
    %c0_i32_0 = arith.constant 0 : i32
    %c0_i32_1 = arith.constant 0 : i32
    return %c0_i32, %c0_i32_0 : i32, i32
  }
  func.func @transform_2(%arg0: i32) -> (i32, i32) {
    %c0_i32 = arith.constant 0 : i32
    %c0_i32_0 = arith.constant 0 : i32
    %c0_i32_1 = arith.constant 0 : i32
    return %c0_i32, %c0_i32_0 : i32, i32
  }
  func.func @transform_3(%arg0: i32) -> (i32, i32) {
    %c0_i32 = arith.constant 0 : i32
    %c0_i32_0 = arith.constant 0 : i32
    %c0_i32_1 = arith.constant 0 : i32
    return %c0_i32, %c0_i32_0 : i32, i32
  }
  func.func @transform_4(%arg0: i32) -> (i32, i32) {
    %c0_i32 = arith.constant 0 : i32
    %c0_i32_0 = arith.constant 0 : i32
    %c0_i32_1 = arith.constant 0 : i32
    return %c0_i32, %c0_i32_0 : i32, i32
  }
  func.func @transform_5(%arg0: i32) -> (i32, i32) {
    %c0_i32 = arith.constant 0 : i32
    %c0_i32_0 = arith.constant 0 : i32
    return %arg0, %c0_i32 : i32, i32
  }
}

</mosaic_0001>

<llo_original>
// kernel: _fc_block_forward_impl.1
$region0: #{_fc_block_forward_impl.1}
  #allocation0 [shape = 'u32[]', space=smem, size = 0x4, offset = 0x4, fixed_abs, tag = 'smem constant byte address 0x4 - core index']
  #allocation1 [shape = 'u32[144,128]{1,0:T(1,128)}', space=vmem, size = 0x12000, scoped, tag = 'internal scratch']
  %s0 = inlined_call_operand.vmem [shape: bf16[256,128], index: 0, kind: input, shape index: {}]
  %s1 = inlined_call_operand.vmem [shape: bf16[128,512], index: 1, kind: input, shape index: {}]
  %s2 = inlined_call_operand.vmem [shape: f32[1,512], index: 2, kind: input, shape index: {}]
  %s3 = inlined_call_operand.vmem [shape: bf16[512,128], index: 3, kind: input, shape index: {}]
  %s4 = inlined_call_operand.vmem [shape: f32[1,128], index: 4, kind: input, shape index: {}]
  %s5 = inlined_call_operand.vmem [shape: f32[256,128], index: 5, kind: output, shape index: {}]
  %s6 = sld [smem:[#allocation0]]
  $region53: #{_fc_block_forward_impl.1} parent=0
    _
  %s8 = ssub.s32 1, %s6
  %s9 = scalar_select 0, %s8, %s6
  loop: start=0, step=1, limit=4
  $region2: #{_fc_block_forward_impl.1} parent=0 // loop_pre_header
    _
  $region3: #{_fc_block_forward_impl.1} parent=0 // loop_header
    %s11 = sphi 0, %s15
    %p12 = scmp.ge.s32.totalorder %s11, 4
    %s21 = sphi 0, %s23
    %s24 = sphi 0, %s21
    %s25 = sphi 0, %s24
    %s41 = sphi 0, %s25
    %s45 = sphi 0, %s45
    %s47 = sphi 0, %s45
    %s48 = sphi 0, %s47
    %s62 = sphi 0, %s48
    %s66 = sphi 0, %s66
    %s68 = sphi 0, %s66
    %s69 = sphi 0, %s68
    %s83 = sphi 0, %s69
    %s87 = sphi 0, %s87
    %s89 = sphi 0, %s87
    %s90 = sphi 0, %s89
    %s104 = sphi 0, %s90
    %s108 = sphi 0, %s108
    %s110 = sphi 0, %s108
    %s111 = sphi 0, %s110
    %s125 = sphi 0, %s111
    %s131 = sphi 0, %s133
    %s134 = sphi 0, %s131
    %s135 = sphi 0, %s134
    %s151 = sphi 0, %s135
  $region4: #{_fc_block_forward_impl.1} parent=0 // loop_header_branch
    %14 = sbr.rel (%p12) target = $region8
  $region5: #{_fc_block_forward_impl.1} parent=0 // loop_body
    %s16 = ssub.s32 %s11, 1
    %s17 = ssub.s32 %s11, 2
    %s18 = sadd.s32 %s11, 1
    %s19 = ssub.s32 %s11, %s18
    %p20 = scmp.eq.s32.totalorder %s19, 0
    %s22 = sadd.s32 %s21, 1
    %s23 = scalar_select %p20, %s21, %s22
    %p26 = pneg %p20
    %p27 = scmp.eq.s32.totalorder %s11, 1
    %p28 = por %p26, %p27
    %p29 = scmp.ne.s32.totalorder %s21, %s24
    %p30 = scmp.eq.s32.totalorder %s11, 0
    %p31 = por %p29, %p30
    %p32 = scmp.ne.s32.totalorder %s21, %s24
    %p33 = scmp.eq.s32.totalorder %s16, 1
    %p34 = por %p32, %p33
    %p35 = scmp.ne.s32.totalorder %s24, %s25
    %p36 = scmp.eq.s32.totalorder %s16, 0
    %p37 = por %p35, %p36
    %p38 = scmp.ne.s32.totalorder %s24, %s25
    %p39 = scmp.eq.s32.totalorder %s17, 1
    %p40 = por %p38, %p39
    %p42 = scmp.ne.s32.totalorder %s25, %s41
    %p43 = scmp.eq.s32.totalorder %s17, 0
    %p44 = por %p42, %p43
    %s46 = sadd.s32 %s45, 1
    %p49 = scmp.eq.s32.totalorder %s11, 1
    %p50 = scmp.ne.s32.totalorder %s45, %s47
    %p51 = scmp.eq.s32.totalorder %s11, 0
    %p52 = por %p50, %p51
    %p53 = scmp.ne.s32.totalorder %s45, %s47
    %p54 = scmp.eq.s32.totalorder %s16, 1
    %p55 = por %p53, %p54
    %p56 = scmp.ne.s32.totalorder %s47, %s48
    %p57 = scmp.eq.s32.totalorder %s16, 0
    %p58 = por %p56, %p57
    %p59 = scmp.ne.s32.totalorder %s47, %s48
    %p60 = scmp.eq.s32.totalorder %s17, 1
    %p61 = por %p59, %p60
    %p63 = scmp.ne.s32.totalorder %s48, %s62
    %p64 = scmp.eq.s32.totalorder %s17, 0
    %p65 = por %p63, %p64
    %s67 = sadd.s32 %s66, 1
    %p70 = scmp.eq.s32.totalorder %s11, 1
    %p71 = scmp.ne.s32.totalorder %s66, %s68
    %p72 = scmp.eq.s32.totalorder %s11, 0
    %p73 = por %p71, %p72
    %p74 = scmp.ne.s32.totalorder %s66, %s68
    %p75 = scmp.eq.s32.totalorder %s16, 1
    %p76 = por %p74, %p75
    %p77 = scmp.ne.s32.totalorder %s68, %s69
    %p78 = scmp.eq.s32.totalorder %s16, 0
    %p79 = por %p77, %p78
    %p80 = scmp.ne.s32.totalorder %s68, %s69
    %p81 = scmp.eq.s32.totalorder %s17, 1
    %p82 = por %p80, %p81
    %p84 = scmp.ne.s32.totalorder %s69, %s83
    %p85 = scmp.eq.s32.totalorder %s17, 0
    %p86 = por %p84, %p85
    %s88 = sadd.s32 %s87, 1
    %p91 = scmp.eq.s32.totalorder %s11, 1
    %p92 = scmp.ne.s32.totalorder %s87, %s89
    %p93 = scmp.eq.s32.totalorder %s11, 0
    %p94 = por %p92, %p93
    %p95 = scmp.ne.s32.totalorder %s87, %s89
    %p96 = scmp.eq.s32.totalorder %s16, 1
    %p97 = por %p95, %p96
    %p98 = scmp.ne.s32.totalorder %s89, %s90
    %p99 = scmp.eq.s32.totalorder %s16, 0
    %p100 = por %p98, %p99
    %p101 = scmp.ne.s32.totalorder %s89, %s90
    %p102 = scmp.eq.s32.totalorder %s17, 1
    %p103 = por %p101, %p102
    %p105 = scmp.ne.s32.totalorder %s90, %s104
    %p106 = scmp.eq.s32.totalorder %s17, 0
    %p107 = por %p105, %p106
    %s109 = sadd.s32 %s108, 1
    %p112 = scmp.eq.s32.totalorder %s11, 1
    %p113 = scmp.ne.s32.totalorder %s108, %s110
    %p114 = scmp.eq.s32.totalorder %s11, 0
    %p115 = por %p113, %p114
    %p116 = scmp.ne.s32.totalorder %s108, %s110
    %p117 = scmp.eq.s32.totalorder %s16, 1
    %p118 = por %p116, %p117
    %p119 = scmp.ne.s32.totalorder %s110, %s111
    %p120 = scmp.eq.s32.totalorder %s16, 0
    %p121 = por %p119, %p120
    %p122 = scmp.ne.s32.totalorder %s110, %s111
    %p123 = scmp.eq.s32.totalorder %s17, 1
    %p124 = por %p122, %p123
    %p126 = scmp.ne.s32.totalorder %s111, %s125
    %p127 = scmp.eq.s32.totalorder %s17, 0
    %p128 = por %p126, %p127
    %s129 = ssub.s32 %s11, %s18
    %p130 = scmp.eq.s32.totalorder %s129, 0
    %s132 = sadd.s32 %s131, 1
    %s133 = scalar_select %p130, %s131, %s132
    %p136 = pneg %p130
    %p137 = scmp.eq.s32.totalorder %s11, 1
    %p138 = por %p136, %p137
    %p139 = scmp.ne.s32.totalorder %s131, %s134
    %p140 = scmp.eq.s32.totalorder %s11, 0
    %p141 = por %p139, %p140
    %p142 = scmp.ne.s32.totalorder %s131, %s134
    %p143 = scmp.eq.s32.totalorder %s16, 1
    %p144 = por %p142, %p143
    %p145 = scmp.ne.s32.totalorder %s134, %s135
    %p146 = scmp.eq.s32.totalorder %s16, 0
    %p147 = por %p145, %p146
    %p148 = scmp.ne.s32.totalorder %s134, %s135
    %p149 = scmp.eq.s32.totalorder %s17, 1
    %p150 = por %p148, %p149
    %p152 = scmp.ne.s32.totalorder %s135, %s151
    %p153 = scmp.eq.s32.totalorder %s17, 0
    %p154 = por %p152, %p153
    %p155 = scmp.le.s32.totalorder 1, %s11
    %p156 = scmp.lt.s32.totalorder %s11, 3
    %p157 = pnand %p155, %p156
    %p158 = pneg %p157
    // Predicated region
    $region9: #{_fc_block_forward_impl.1} parent=5 // pred_check
      _
    $region10: #{_fc_block_forward_impl.1} parent=5 // pred_check_branch
      %160 = sbr.rel (%p157) target = $region12
    $region11: #{_fc_block_forward_impl.1} parent=5 // pred_region
      %s161 = ssub.s32 %s11, 1
      // Predicated region
      $region13: #{_fc_block_forward_impl.1} parent=11 // pred_check
        %p162 = pneg %p58
      $region14: #{_fc_block_forward_impl.1} parent=11 // pred_check_branch
        %164 = sbr.rel (%p162) target = $region16
      $region15: #{_fc_block_forward_impl.1} parent=11 // pred_region
        _
      $region16: #{_fc_block_forward_impl.1} parent=11 // pred_fallthru
        _
      // Predicated region
      $region17: #{_fc_block_forward_impl.1} parent=11 // pred_check
        %p165 = pneg %p79
      $region18: #{_fc_block_forward_impl.1} parent=11 // pred_check_branch
        %167 = sbr.rel (%p165) target = $region20
      $region19: #{_fc_block_forward_impl.1} parent=11 // pred_region
        _
      $region20: #{_fc_block_forward_impl.1} parent=11 // pred_fallthru
        _
      // Predicated region
      $region21: #{_fc_block_forward_impl.1} parent=11 // pred_check
        %p168 = pneg %p100
      $region22: #{_fc_block_forward_impl.1} parent=11 // pred_check_branch
        %170 = sbr.rel (%p168) target = $region24
      $region23: #{_fc_block_forward_impl.1} parent=11 // pred_region
        _
      $region24: #{_fc_block_forward_impl.1} parent=11 // pred_fallthru
        _
      // Predicated region
      $region25: #{_fc_block_forward_impl.1} parent=11 // pred_check
        %p171 = pneg %p121
      $region26: #{_fc_block_forward_impl.1} parent=11 // pred_check_branch
        %173 = sbr.rel (%p171) target = $region28
      $region27: #{_fc_block_forward_impl.1} parent=11 // pred_region
        _
      $region28: #{_fc_block_forward_impl.1} parent=11 // pred_fallthru
        _
    $region12: #{_fc_block_forward_impl.1} parent=5 // pred_fallthru
      _
    %p174 = scmp.lt.s32.totalorder %s11, 2
    // Predicated region
    $region29: #{_fc_block_forward_impl.1} parent=5 // pred_check
      %p175 = pneg %p174
    $region30: #{_fc_block_forward_impl.1} parent=5 // pred_check_branch
      %177 = sbr.rel (%p175) target = $region32
    $region31: #{_fc_block_forward_impl.1} parent=5 // pred_region
      // Predicated region
      $region33: #{_fc_block_forward_impl.1} parent=31 // pred_check
        %p178 = pneg %p31
      $region34: #{_fc_block_forward_impl.1} parent=31 // pred_check_branch
        %180 = sbr.rel (%p178) target = $region36
      $region35: #{_fc_block_forward_impl.1} parent=31 // pred_region
        %s181 = smul.u32 16, %s11
        %p182 = scmp.lt.s32.totalorder %s181, 31
        %s183 = scalar_select %p182, %s181, 31
        %s184 = smul.addr %s183, 4
        %s185 = scalar_lea.vmem %s0, %s184
        %s186 = smul.u32 16, %s11
      $region36: #{_fc_block_forward_impl.1} parent=31 // pred_fallthru
        _
    $region32: #{_fc_block_forward_impl.1} parent=5 // pred_fallthru
      _
    %p187 = scmp.le.s32.totalorder 1, %s11
    %p188 = scmp.lt.s32.totalorder %s11, 3
    %p189 = pnand %p187, %p188
    %p190 = pneg %p189
    // Predicated region
    $region37: #{_fc_block_forward_impl.1} parent=5 // pred_check
      _
    $region38: #{_fc_block_forward_impl.1} parent=5 // pred_check_branch
      %192 = sbr.rel (%p189) target = $region40
    $region39: #{_fc_block_forward_impl.1} parent=5 // pred_region
      %s193 = ssub.s32 %s11, 1
      %s194 = smul.u32 16, %s16
      %p195 = scmp.lt.s32.totalorder %s194, 31
      %s196 = scalar_select %p195, %s194, 31
      %s197 = smul.addr %s196, 4
      %s198 = scalar_lea.vmem %s0, %s197
      %p199 = pneg %p37
      %p200 = pneg %p34
      %p201 = pneg %p58
      %p202 = pneg %p55
      %p203 = pneg %p79
      %p204 = pneg %p76
      %p205 = pneg %p100
      %p206 = pneg %p97
      %p207 = pneg %p121
      %p208 = pneg %p118
      %p209 = pneg %p147
      %p210 = pneg %p144
      %s211 = smul.u32 16, %s16
      %p212 = scmp.lt.s32.totalorder %s211, 31
      %s213 = scalar_select %p212, %s211, 31
      %s214 = smul.addr %s213, 8
      %s215 = scalar_lea.vmem %s5, %s214
      %s216 = smul.u32 16, %s16
      %p217 = scmp.lt.s32.totalorder %s216, 31
      %s218 = scalar_select %p217, %s216, 31
      %s219 = smul.addr %s218, 4
      %s220 = scalar_lea.vmem %s0, %s219
      %s221 = smul.u32 16, %s16
      %s222 = smul.u32 16, %s16
      %p223 = scmp.lt.s32.totalorder %s222, 31
      %s224 = scalar_select %p223, %s222, 31
      %s225 = smul.addr %s224, 8
      %s226 = scalar_lea.vmem %s5, %s225
      %s227 = smul.u32 16, %s16
      %v229 = vld [vmem:[%s220] sm:$0xf]
      %v230 = vld [vmem:[%s220 + $0x4] sm:$0xf]
      %v231 = vld [vmem:[%s220 + $0x8] sm:$0xf]
      %v232 = vld [vmem:[%s220 + $0xc] sm:$0xf]
      %v233 = vld [vmem:[%s220 + $0x10] sm:$0xf]
      %v234 = vld [vmem:[%s220 + $0x14] sm:$0xf]
      %v235 = vld [vmem:[%s220 + $0x18] sm:$0xf]
      %v236 = vld [vmem:[%s220 + $0x1c] sm:$0xf]
      %v237 = vld [vmem:[%s220 + $0x20] sm:$0xf]
      %v238 = vld [vmem:[%s220 + $0x24] sm:$0xf]
      %v239 = vld [vmem:[%s220 + $0x28] sm:$0xf]
      %v240 = vld [vmem:[%s220 + $0x2c] sm:$0xf]
      %v241 = vld [vmem:[%s220 + $0x30] sm:$0xf]
      %v242 = vld [vmem:[%s220 + $0x34] sm:$0xf]
      %v243 = vld [vmem:[%s220 + $0x38] sm:$0xf]
      %v244 = vld [vmem:[%s220 + $0x3c] sm:$0xf]
      %v245 = vld [vmem:[%s1] sm:$0xff]
      %v246 = vld [vmem:[%s1 + $0x8] sm:$0xff]
      %v247 = vld [vmem:[%s1 + $0x10] sm:$0xff]
      %v248 = vld [vmem:[%s1 + $0x18] sm:$0xff]
      %v249 = vld [vmem:[%s1 + $0x20] sm:$0xff]
      %v250 = vld [vmem:[%s1 + $0x28] sm:$0xff]
      %v251 = vld [vmem:[%s1 + $0x30] sm:$0xff]
      %v252 = vld [vmem:[%s1 + $0x38] sm:$0xff]
      %v253 = vld [vmem:[%s1 + $0x40] sm:$0xff]
      %v254 = vld [vmem:[%s1 + $0x48] sm:$0xff]
      %v255 = vld [vmem:[%s1 + $0x50] sm:$0xff]
      %v256 = vld [vmem:[%s1 + $0x58] sm:$0xff]
      %v257 = vld [vmem:[%s1 + $0x60] sm:$0xff]
      %v258 = vld [vmem:[%s1 + $0x68] sm:$0xff]
      %v259 = vld [vmem:[%s1 + $0x70] sm:$0xff]
      %v260 = vld [vmem:[%s1 + $0x78] sm:$0xff]
      %v261 = vld [vmem:[%s1 + $0x80] sm:$0xff]
      %v262 = vld [vmem:[%s1 + $0x88] sm:$0xff]
      %v263 = vld [vmem:[%s1 + $0x90] sm:$0xff]
      %v264 = vld [vmem:[%s1 + $0x98] sm:$0xff]
      %v265 = vld [vmem:[%s1 + $0xa0] sm:$0xff]
      %v266 = vld [vmem:[%s1 + $0xa8] sm:$0xff]
      %v267 = vld [vmem:[%s1 + $0xb0] sm:$0xff]
      %v268 = vld [vmem:[%s1 + $0xb8] sm:$0xff]
      %v269 = vld [vmem:[%s1 + $0xc0] sm:$0xff]
      %v270 = vld [vmem:[%s1 + $0xc8] sm:$0xff]
      %v271 = vld [vmem:[%s1 + $0xd0] sm:$0xff]
      %v272 = vld [vmem:[%s1 + $0xd8] sm:$0xff]
      %v273 = vld [vmem:[%s1 + $0xe0] sm:$0xff]
      %v274 = vld [vmem:[%s1 + $0xe8] sm:$0xff]
      %v275 = vld [vmem:[%s1 + $0xf0] sm:$0xff]
      %v276 = vld [vmem:[%s1 + $0xf8] sm:$0xff]
      %v277 = vld [vmem:[%s2] sm:$0xf]
      %v279 = vlaneseq
      %v280 = vshrl.u32 %v279, 7
      %v281 = vsub.s32 0, %v280
      %v282 = vrot.slane %v277, %v281
      %v283 = vlaneseq
      %v284 = vshrl.u32 %v283, 7
      %v285 = vsub.s32 1, %v284
      %v286 = vrot.slane %v277, %v285
      %v287 = vlaneseq
      %v288 = vshrl.u32 %v287, 7
      %v289 = vsub.s32 2, %v288
      %v290 = vrot.slane %v277, %v289
      %v291 = vlaneseq
      %v292 = vshrl.u32 %v291, 7
      %v293 = vsub.s32 3, %v292
      %v294 = vrot.slane %v277, %v293
      %v315 = vunpack.c.l.b16 %v229
      %v316 = vunpack.c.l.b16 %v230
      %v317 = vunpack.c.l.b16 %v231
      %v318 = vunpack.c.l.b16 %v232
      %v319 = vunpack.c.l.b16 %v233
      %v320 = vunpack.c.l.b16 %v234
      %v321 = vunpack.c.l.b16 %v235
      %v322 = vunpack.c.l.b16 %v236
      %v323 = vunpack.c.l.b16 %v237
      %v324 = vunpack.c.l.b16 %v238
      %v325 = vunpack.c.l.b16 %v239
      %v326 = vunpack.c.l.b16 %v240
      %v327 = vunpack.c.l.b16 %v241
      %v328 = vunpack.c.l.b16 %v242
      %v329 = vunpack.c.l.b16 %v243
      %v330 = vunpack.c.l.b16 %v244
      %v331 = vpack.c.b16 %v316, %v315
      %v332 = vpack.c.b16 %v318, %v317
      %v333 = vpack.c.b16 %v320, %v319
      %v334 = vpack.c.b16 %v322, %v321
      %v335 = vpack.c.b16 %v324, %v323
      %v336 = vpack.c.b16 %v326, %v325
      %v337 = vpack.c.b16 %v328, %v327
      %v338 = vpack.c.b16 %v330, %v329
      %v379 = vunpack.c.l.b16 %v245
      %v380 = vunpack.c.h.b16 %v245
      %v381 = vunpack.c.l.b16 %v246
      %v382 = vunpack.c.h.b16 %v246
      %v383 = vunpack.c.l.b16 %v247
      %v384 = vunpack.c.h.b16 %v247
      %v385 = vunpack.c.l.b16 %v248
      %v386 = vunpack.c.h.b16 %v248
      %v387 = vunpack.c.l.b16 %v249
      %v388 = vunpack.c.h.b16 %v249
      %v389 = vunpack.c.l.b16 %v250
      %v390 = vunpack.c.h.b16 %v250
      %v391 = vunpack.c.l.b16 %v251
      %v392 = vunpack.c.h.b16 %v251
      %v393 = vunpack.c.l.b16 %v252
      %v394 = vunpack.c.h.b16 %v252
      %v395 = vunpack.c.l.b16 %v253
      %v396 = vunpack.c.h.b16 %v253
      %v397 = vunpack.c.l.b16 %v254
      %v398 = vunpack.c.h.b16 %v254
      %v399 = vunpack.c.l.b16 %v255
      %v400 = vunpack.c.h.b16 %v255
      %v401 = vunpack.c.l.b16 %v256
      %v402 = vunpack.c.h.b16 %v256
      %v403 = vunpack.c.l.b16 %v257
      %v404 = vunpack.c.h.b16 %v257
      %v405 = vunpack.c.l.b16 %v258
      %v406 = vunpack.c.h.b16 %v258
      %v407 = vunpack.c.l.b16 %v259
      %v408 = vunpack.c.h.b16 %v259
      %v409 = vunpack.c.l.b16 %v260
      %v410 = vunpack.c.h.b16 %v260
      %v411 = vunpack.c.l.b16 %v261
      %v412 = vunpack.c.h.b16 %v261
      %v413 = vunpack.c.l.b16 %v262
      %v414 = vunpack.c.h.b16 %v262
      %v415 = vunpack.c.l.b16 %v263
      %v416 = vunpack.c.h.b16 %v263
      %v417 = vunpack.c.l.b16 %v264
      %v418 = vunpack.c.h.b16 %v264
      %v419 = vunpack.c.l.b16 %v265
      %v420 = vunpack.c.h.b16 %v265
      %v421 = vunpack.c.l.b16 %v266
      %v422 = vunpack.c.h.b16 %v266
      %v423 = vunpack.c.l.b16 %v267
      %v424 = vunpack.c.h.b16 %v267
      %v425 = vunpack.c.l.b16 %v268
      %v426 = vunpack.c.h.b16 %v268
      %v427 = vunpack.c.l.b16 %v269
      %v428 = vunpack.c.h.b16 %v269
      %v429 = vunpack.c.l.b16 %v270
      %v430 = vunpack.c.h.b16 %v270
      %v431 = vunpack.c.l.b16 %v271
      %v432 = vunpack.c.h.b16 %v271
      %v433 = vunpack.c.l.b16 %v272
      %v434 = vunpack.c.h.b16 %v272
      %v435 = vunpack.c.l.b16 %v273
      %v436 = vunpack.c.h.b16 %v273
      %v437 = vunpack.c.l.b16 %v274
      %v438 = vunpack.c.h.b16 %v274
      %v439 = vunpack.c.l.b16 %v275
      %v440 = vunpack.c.h.b16 %v275
      %v441 = vunpack.c.l.b16 %v276
      %v442 = vunpack.c.h.b16 %v276
      %v443 = vpack.c.b16 %v383, %v379
      %v444 = vpack.c.b16 %v384, %v380
      %v445 = vpack.c.b16 %v385, %v381
      %v446 = vpack.c.b16 %v386, %v382
      %v447 = vpack.c.b16 %v391, %v387
      %v448 = vpack.c.b16 %v392, %v388
      %v449 = vpack.c.b16 %v393, %v389
      %v450 = vpack.c.b16 %v394, %v390
      %v451 = vpack.c.b16 %v399, %v395
      %v452 = vpack.c.b16 %v400, %v396
      %v453 = vpack.c.b16 %v401, %v397
      %v454 = vpack.c.b16 %v402, %v398
      %v455 = vpack.c.b16 %v407, %v403
      %v456 = vpack.c.b16 %v408, %v404
      %v457 = vpack.c.b16 %v409, %v405
      %v458 = vpack.c.b16 %v410, %v406
      %v459 = vpack.c.b16 %v415, %v411
      %v460 = vpack.c.b16 %v416, %v412
      %v461 = vpack.c.b16 %v417, %v413
      %v462 = vpack.c.b16 %v418, %v414
      %v463 = vpack.c.b16 %v423, %v419
      %v464 = vpack.c.b16 %v424, %v420
      %v465 = vpack.c.b16 %v425, %v421
      %v466 = vpack.c.b16 %v426, %v422
      %v467 = vpack.c.b16 %v431, %v427
      %v468 = vpack.c.b16 %v432, %v428
      %v469 = vpack.c.b16 %v433, %v429
      %v470 = vpack.c.b16 %v434, %v430
      %v471 = vpack.c.b16 %v439, %v435
      %v472 = vpack.c.b16 %v440, %v436
      %v473 = vpack.c.b16 %v441, %v437
      %v474 = vpack.c.b16 %v442, %v438
      %507 = vmatprep.subr.bf16.mxu0 %v472
      %508 = vmatpush1.bf16.msra.mxu0 %v471
      %509 = vmatprep.subr.bf16.mxu0 %v468
      %510 = vmatpush1.bf16.msra.mxu0 %v467
      %511 = vmatprep.subr.bf16.mxu0 %v464
      %512 = vmatpush1.bf16.msra.mxu0 %v463
      %513 = vmatprep.subr.bf16.mxu0 %v460
      %514 = vmatpush1.bf16.msra.mxu0 %v459
      %515 = vmatprep.subr.bf16.mxu0 %v456
      %516 = vmatpush1.bf16.msra.mxu0 %v455
      %517 = vmatprep.subr.bf16.mxu0 %v452
      %518 = vmatpush1.bf16.msra.mxu0 %v451
      %519 = vmatprep.subr.bf16.mxu0 %v448
      %520 = vmatpush1.bf16.msra.mxu0 %v447
      %521 = vmatprep.subr.bf16.mxu0 %v444
      %522 = vmatpush1.bf16.msra.mxu0 %v443
      %523 = vmatprep.subr.bf16.mxu0 0
      %524 = vmatpush2.bf16.msra.mxu0 0
      %525 = vmatprep.subr.bf16.mxu0 0
      %526 = vmatpush2.bf16.msra.mxu0 0
      %527 = vmatprep.subr.bf16.mxu0 0
      %528 = vmatpush2.bf16.msra.mxu0 0
      %529 = vmatprep.subr.bf16.mxu0 0
      %530 = vmatpush2.bf16.msra.mxu0 0
      %531 = vmatprep.subr.bf16.mxu0 0
      %532 = vmatpush2.bf16.msra.mxu0 0
      %533 = vmatprep.subr.bf16.mxu0 0
      %534 = vmatpush2.bf16.msra.mxu0 0
      %535 = vmatprep.subr.bf16.mxu0 0
      %536 = vmatpush2.bf16.msra.mxu0 0
      %537 = vmatprep.subr.bf16.mxu0 0
      %538 = vmatpush2.bf16.msra.mxu0 0
      %539 = vmatprep.mubr.bf16.mxu0 0
      %540 = vmatmul.mubr.bf16.gmra.mxu0 %v331
      %v541 = vpop.f32.mrf.mxu0
      %v542 = vadd.f32 %v282, %v541
      %v543 = vpop.f32.mrf.mxu0
      %v544 = vadd.f32 %v286, %v543
      %v545 = vpop.f32.mrf.mxu0
      %v546 = vadd.f32 %v282, %v545
      %v547 = vpop.f32.mrf.mxu0
      %v548 = vadd.f32 %v286, %v547
      %549 = vmatprep.mubr.bf16.mxu0 0
      %550 = vmatmul.mubr.bf16.gmra.mxu0 %v332
      %v551 = vpop.f32.mrf.mxu0
      %v552 = vadd.f32 %v282, %v551
      %v553 = vpop.f32.mrf.mxu0
      %v554 = vadd.f32 %v286, %v553
      %v555 = vpop.f32.mrf.mxu0
      %v556 = vadd.f32 %v282, %v555
      %v557 = vpop.f32.mrf.mxu0
      %v558 = vadd.f32 %v286, %v557
      %559 = vmatprep.mubr.bf16.mxu0 0
      %560 = vmatmul.mubr.bf16.gmra.mxu0 %v333
      %v561 = vpop.f32.mrf.mxu0
      %v562 = vadd.f32 %v282, %v561
      %v563 = vpop.f32.mrf.mxu0
      %v564 = vadd.f32 %v286, %v563
      %v565 = vpop.f32.mrf.mxu0
      %v566 = vadd.f32 %v282, %v565
      %v567 = vpop.f32.mrf.mxu0
      %v568 = vadd.f32 %v286, %v567
      %569 = vmatprep.mubr.bf16.mxu0 0
      %570 = vmatmul.mubr.bf16.gmra.mxu0 %v334
      %v571 = vpop.f32.mrf.mxu0
      %v572 = vadd.f32 %v282, %v571
      %v573 = vpop.f32.mrf.mxu0
      %v574 = vadd.f32 %v286, %v573
      %v575 = vpop.f32.mrf.mxu0
      %v576 = vadd.f32 %v282, %v575
      %v577 = vpop.f32.mrf.mxu0
      %v578 = vadd.f32 %v286, %v577
      %579 = vmatprep.mubr.bf16.mxu0 0
      %580 = vmatmul.mubr.bf16.gmra.mxu0 %v335
      %v581 = vpop.f32.mrf.mxu0
      %v582 = vadd.f32 %v282, %v581
      %v583 = vpop.f32.mrf.mxu0
      %v584 = vadd.f32 %v286, %v583
      %v585 = vpop.f32.mrf.mxu0
      %v586 = vadd.f32 %v282, %v585
      %v587 = vpop.f32.mrf.mxu0
      %v588 = vadd.f32 %v286, %v587
      %589 = vmatprep.mubr.bf16.mxu0 0
      %590 = vmatmul.mubr.bf16.gmra.mxu0 %v336
      %v591 = vpop.f32.mrf.mxu0
      %v592 = vadd.f32 %v282, %v591
      %v593 = vpop.f32.mrf.mxu0
      %v594 = vadd.f32 %v286, %v593
      %v595 = vpop.f32.mrf.mxu0
      %v596 = vadd.f32 %v282, %v595
      %v597 = vpop.f32.mrf.mxu0
      %v598 = vadd.f32 %v286, %v597
      %599 = vmatprep.mubr.bf16.mxu0 0
      %600 = vmatmul.mubr.bf16.gmra.mxu0 %v337
      %v601 = vpop.f32.mrf.mxu0
      %v602 = vadd.f32 %v282, %v601
      %v603 = vpop.f32.mrf.mxu0
      %v604 = vadd.f32 %v286, %v603
      %v605 = vpop.f32.mrf.mxu0
      %v606 = vadd.f32 %v282, %v605
      %v607 = vpop.f32.mrf.mxu0
      %v608 = vadd.f32 %v286, %v607
      %609 = vmatprep.mubr.bf16.mxu0 0
      %610 = vmatmul.mubr.bf16.gmra.mxu0 %v338
      %v611 = vpop.f32.mrf.mxu0
      %v612 = vadd.f32 %v282, %v611
      %v613 = vpop.f32.mrf.mxu0
      %v614 = vadd.f32 %v286, %v613
      %v615 = vpop.f32.mrf.mxu0
      %v616 = vadd.f32 %v282, %v615
      %v617 = vpop.f32.mrf.mxu0
      %v618 = vadd.f32 %v286, %v617
      %619 = vdwg.mxu0
      %620 = vmatprep.subr.bf16.mxu0 %v474
      %621 = vmatpush1.bf16.msra.mxu0 %v473
      %622 = vmatprep.subr.bf16.mxu0 %v470
      %623 = vmatpush1.bf16.msra.mxu0 %v469
      %624 = vmatprep.subr.bf16.mxu0 %v466
      %625 = vmatpush1.bf16.msra.mxu0 %v465
      %626 = vmatprep.subr.bf16.mxu0 %v462
      %627 = vmatpush1.bf16.msra.mxu0 %v461
      %628 = vmatprep.subr.bf16.mxu0 %v458
      %629 = vmatpush1.bf16.msra.mxu0 %v457
      %630 = vmatprep.subr.bf16.mxu0 %v454
      %631 = vmatpush1.bf16.msra.mxu0 %v453
      %632 = vmatprep.subr.bf16.mxu0 %v450
      %633 = vmatpush1.bf16.msra.mxu0 %v449
      %634 = vmatprep.subr.bf16.mxu0 %v446
      %635 = vmatpush1.bf16.msra.mxu0 %v445
      %636 = vmatprep.subr.bf16.mxu0 0
      %637 = vmatpush2.bf16.msra.mxu0 0
      %638 = vmatprep.subr.bf16.mxu0 0
      %639 = vmatpush2.bf16.msra.mxu0 0
      %640 = vmatprep.subr.bf16.mxu0 0
      %641 = vmatpush2.bf16.msra.mxu0 0
      %642 = vmatprep.subr.bf16.mxu0 0
      %643 = vmatpush2.bf16.msra.mxu0 0
      %644 = vmatprep.subr.bf16.mxu0 0
      %645 = vmatpush2.bf16.msra.mxu0 0
      %646 = vmatprep.subr.bf16.mxu0 0
      %647 = vmatpush2.bf16.msra.mxu0 0
      %648 = vmatprep.subr.bf16.mxu0 0
      %649 = vmatpush2.bf16.msra.mxu0 0
      %650 = vmatprep.subr.bf16.mxu0 0
      %651 = vmatpush2.bf16.msra.mxu0 0
      %652 = vmatprep.mubr.bf16.mxu0 0
      %653 = vmatmul.mubr.bf16.gmra.mxu0 %v331
      %v654 = vpop.f32.mrf.mxu0
      %v655 = vadd.f32 %v290, %v654
      %v656 = vpop.f32.mrf.mxu0
      %v657 = vadd.f32 %v294, %v656
      %v658 = vpop.f32.mrf.mxu0
      %v659 = vadd.f32 %v290, %v658
      %v660 = vpop.f32.mrf.mxu0
      %v661 = vadd.f32 %v294, %v660
      %662 = vmatprep.mubr.bf16.mxu0 0
      %663 = vmatmul.mubr.bf16.gmra.mxu0 %v332
      %v664 = vpop.f32.mrf.mxu0
      %v665 = vadd.f32 %v290, %v664
      %v666 = vpop.f32.mrf.mxu0
      %v667 = vadd.f32 %v294, %v666
      %v668 = vpop.f32.mrf.mxu0
      %v669 = vadd.f32 %v290, %v668
      %v670 = vpop.f32.mrf.mxu0
      %v671 = vadd.f32 %v294, %v670
      %672 = vmatprep.mubr.bf16.mxu0 0
      %673 = vmatmul.mubr.bf16.gmra.mxu0 %v333
      %v674 = vpop.f32.mrf.mxu0
      %v675 = vadd.f32 %v290, %v674
      %v676 = vpop.f32.mrf.mxu0
      %v677 = vadd.f32 %v294, %v676
      %v678 = vpop.f32.mrf.mxu0
      %v679 = vadd.f32 %v290, %v678
      %v680 = vpop.f32.mrf.mxu0
      %v681 = vadd.f32 %v294, %v680
      %682 = vmatprep.mubr.bf16.mxu0 0
      %683 = vmatmul.mubr.bf16.gmra.mxu0 %v334
      %v684 = vpop.f32.mrf.mxu0
      %v685 = vadd.f32 %v290, %v684
      %v686 = vpop.f32.mrf.mxu0
      %v687 = vadd.f32 %v294, %v686
      %v688 = vpop.f32.mrf.mxu0
      %v689 = vadd.f32 %v290, %v688
      %v690 = vpop.f32.mrf.mxu0
      %v691 = vadd.f32 %v294, %v690
      %692 = vmatprep.mubr.bf16.mxu0 0
      %693 = vmatmul.mubr.bf16.gmra.mxu0 %v335
      %v694 = vpop.f32.mrf.mxu0
      %v695 = vadd.f32 %v290, %v694
      %v696 = vpop.f32.mrf.mxu0
      %v697 = vadd.f32 %v294, %v696
      %v698 = vpop.f32.mrf.mxu0
      %v699 = vadd.f32 %v290, %v698
      %v700 = vpop.f32.mrf.mxu0
      %v701 = vadd.f32 %v294, %v700
      %702 = vmatprep.mubr.bf16.mxu0 0
      %703 = vmatmul.mubr.bf16.gmra.mxu0 %v336
      %v704 = vpop.f32.mrf.mxu0
      %v705 = vadd.f32 %v290, %v704
      %v706 = vpop.f32.mrf.mxu0
      %v707 = vadd.f32 %v294, %v706
      %v708 = vpop.f32.mrf.mxu0
      %v709 = vadd.f32 %v290, %v708
      %v710 = vpop.f32.mrf.mxu0
      %v711 = vadd.f32 %v294, %v710
      %712 = vmatprep.mubr.bf16.mxu0 0
      %713 = vmatmul.mubr.bf16.gmra.mxu0 %v337
      %v714 = vpop.f32.mrf.mxu0
      %v715 = vadd.f32 %v290, %v714
      %v716 = vpop.f32.mrf.mxu0
      %v717 = vadd.f32 %v294, %v716
      %v718 = vpop.f32.mrf.mxu0
      %v719 = vadd.f32 %v290, %v718
      %v720 = vpop.f32.mrf.mxu0
      %v721 = vadd.f32 %v294, %v720
      %722 = vmatprep.mubr.bf16.mxu0 0
      %723 = vmatmul.mubr.bf16.gmra.mxu0 %v338
      %v724 = vpop.f32.mrf.mxu0
      %v725 = vadd.f32 %v290, %v724
      %v726 = vpop.f32.mrf.mxu0
      %v727 = vadd.f32 %v294, %v726
      %v728 = vpop.f32.mrf.mxu0
      %v729 = vadd.f32 %v290, %v728
      %v730 = vpop.f32.mrf.mxu0
      %v731 = vadd.f32 %v294, %v730
      %732 = vdwg.mxu0
      %v733 = vmul.f32 %v542, 0.5
      %v734 = vmul.f32 %v544, 0.5
      %v735 = vmul.f32 %v655, 0.5
      %v736 = vmul.f32 %v657, 0.5
      %v737 = vmul.f32 %v546, 0.5
      %v738 = vmul.f32 %v548, 0.5
      %v739 = vmul.f32 %v659, 0.5
      %v740 = vmul.f32 %v661, 0.5
      %v741 = vmul.f32 %v552, 0.5
      %v742 = vmul.f32 %v554, 0.5
      %v743 = vmul.f32 %v665, 0.5
      %v744 = vmul.f32 %v667, 0.5
      %v745 = vmul.f32 %v556, 0.5
      %v746 = vmul.f32 %v558, 0.5
      %v747 = vmul.f32 %v669, 0.5
      %v748 = vmul.f32 %v671, 0.5
      %v749 = vmul.f32 %v562, 0.5
      %v750 = vmul.f32 %v564, 0.5
      %v751 = vmul.f32 %v675, 0.5
      %v752 = vmul.f32 %v677, 0.5
      %v753 = vmul.f32 %v566, 0.5
      %v754 = vmul.f32 %v568, 0.5
      %v755 = vmul.f32 %v679, 0.5
      %v756 = vmul.f32 %v681, 0.5
      %v757 = vmul.f32 %v572, 0.5
      %v758 = vmul.f32 %v574, 0.5
      %v759 = vmul.f32 %v685, 0.5
      %v760 = vmul.f32 %v687, 0.5
      %v761 = vmul.f32 %v576, 0.5
      %v762 = vmul.f32 %v578, 0.5
      %v763 = vmul.f32 %v689, 0.5
      %v764 = vmul.f32 %v691, 0.5
      %v765 = vmul.f32 %v582, 0.5
      %v766 = vmul.f32 %v584, 0.5
      %v767 = vmul.f32 %v695, 0.5
      %v768 = vmul.f32 %v697, 0.5
      %v769 = vmul.f32 %v586, 0.5
      %v770 = vmul.f32 %v588, 0.5
      %v771 = vmul.f32 %v699, 0.5
      %v772 = vmul.f32 %v701, 0.5
      %v773 = vmul.f32 %v592, 0.5
      %v774 = vmul.f32 %v594, 0.5
      %v775 = vmul.f32 %v705, 0.5
      %v776 = vmul.f32 %v707, 0.5
      %v777 = vmul.f32 %v596, 0.5
      %v778 = vmul.f32 %v598, 0.5
      %v779 = vmul.f32 %v709, 0.5
      %v780 = vmul.f32 %v711, 0.5
      %v781 = vmul.f32 %v602, 0.5
      %v782 = vmul.f32 %v604, 0.5
      %v783 = vmul.f32 %v715, 0.5
      %v784 = vmul.f32 %v717, 0.5
      %v785 = vmul.f32 %v606, 0.5
      %v786 = vmul.f32 %v608, 0.5
      %v787 = vmul.f32 %v719, 0.5
      %v788 = vmul.f32 %v721, 0.5
      %v789 = vmul.f32 %v612, 0.5
      %v790 = vmul.f32 %v614, 0.5
      %v791 = vmul.f32 %v725, 0.5
      %v792 = vmul.f32 %v727, 0.5
      %v793 = vmul.f32 %v616, 0.5
      %v794 = vmul.f32 %v618, 0.5
      %v795 = vmul.f32 %v729, 0.5
      %v796 = vmul.f32 %v731, 0.5
      %v797 = vmul.f32 %v542, 0.70710677
      %v798 = vmul.f32 %v544, 0.70710677
      %v799 = vmul.f32 %v655, 0.70710677
      %v800 = vmul.f32 %v657, 0.70710677
      %v801 = vmul.f32 %v546, 0.70710677
      %v802 = vmul.f32 %v548, 0.70710677
      %v803 = vmul.f32 %v659, 0.70710677
      %v804 = vmul.f32 %v661, 0.70710677
      %v805 = vmul.f32 %v552, 0.70710677
      %v806 = vmul.f32 %v554, 0.70710677
      %v807 = vmul.f32 %v665, 0.70710677
      %v808 = vmul.f32 %v667, 0.70710677
      %v809 = vmul.f32 %v556, 0.70710677
      %v810 = vmul.f32 %v558, 0.70710677
      %v811 = vmul.f32 %v669, 0.70710677
      %v812 = vmul.f32 %v671, 0.70710677
      %v813 = vmul.f32 %v562, 0.70710677
      %v814 = vmul.f32 %v564, 0.70710677
      %v815 = vmul.f32 %v675, 0.70710677
      %v816 = vmul.f32 %v677, 0.70710677
      %v817 = vmul.f32 %v566, 0.70710677
      %v818 = vmul.f32 %v568, 0.70710677
      %v819 = vmul.f32 %v679, 0.70710677
      %v820 = vmul.f32 %v681, 0.70710677
      %v821 = vmul.f32 %v572, 0.70710677
      %v822 = vmul.f32 %v574, 0.70710677
      %v823 = vmul.f32 %v685, 0.70710677
      %v824 = vmul.f32 %v687, 0.70710677
      %v825 = vmul.f32 %v576, 0.70710677
      %v826 = vmul.f32 %v578, 0.70710677
      %v827 = vmul.f32 %v689, 0.70710677
      %v828 = vmul.f32 %v691, 0.70710677
      %v829 = vmul.f32 %v582, 0.70710677
      %v830 = vmul.f32 %v584, 0.70710677
      %v831 = vmul.f32 %v695, 0.70710677
      %v832 = vmul.f32 %v697, 0.70710677
      %v833 = vmul.f32 %v586, 0.70710677
      %v834 = vmul.f32 %v588, 0.70710677
      %v835 = vmul.f32 %v699, 0.70710677
      %v836 = vmul.f32 %v701, 0.70710677
      %v837 = vmul.f32 %v592, 0.70710677
      %v838 = vmul.f32 %v594, 0.70710677
      %v839 = vmul.f32 %v705, 0.70710677
      %v840 = vmul.f32 %v707, 0.70710677
      %v841 = vmul.f32 %v596, 0.70710677
      %v842 = vmul.f32 %v598, 0.70710677
      %v843 = vmul.f32 %v709, 0.70710677
      %v844 = vmul.f32 %v711, 0.70710677
      %v845 = vmul.f32 %v602, 0.70710677
      %v846 = vmul.f32 %v604, 0.70710677
      %v847 = vmul.f32 %v715, 0.70710677
      %v848 = vmul.f32 %v717, 0.70710677
      %v849 = vmul.f32 %v606, 0.70710677
      %v850 = vmul.f32 %v608, 0.70710677
      %v851 = vmul.f32 %v719, 0.70710677
      %v852 = vmul.f32 %v721, 0.70710677
      %v853 = vmul.f32 %v612, 0.70710677
      %v854 = vmul.f32 %v614, 0.70710677
      %v855 = vmul.f32 %v725, 0.70710677
      %v856 = vmul.f32 %v727, 0.70710677
      %v857 = vmul.f32 %v616, 0.70710677
      %v858 = vmul.f32 %v618, 0.70710677
      %v859 = vmul.f32 %v729, 0.70710677
      %v860 = vmul.f32 %v731, 0.70710677
      %v861 = verf.f32.pop %v797
      %v862 = verf.f32.pop %v798
      %v863 = verf.f32.pop %v799
      %v864 = verf.f32.pop %v800
      %v865 = verf.f32.pop %v801
      %v866 = verf.f32.pop %v802
      %v867 = verf.f32.pop %v803
      %v868 = verf.f32.pop %v804
      %v869 = verf.f32.pop %v805
      %v870 = verf.f32.pop %v806
      %v871 = verf.f32.pop %v807
      %v872 = verf.f32.pop %v808
      %v873 = verf.f32.pop %v809
      %v874 = verf.f32.pop %v810
      %v875 = verf.f32.pop %v811
      %v876 = verf.f32.pop %v812
      %v877 = verf.f32.pop %v813
      %v878 = verf.f32.pop %v814
      %v879 = verf.f32.pop %v815
      %v880 = verf.f32.pop %v816
      %v881 = verf.f32.pop %v817
      %v882 = verf.f32.pop %v818
      %v883 = verf.f32.pop %v819
      %v884 = verf.f32.pop %v820
      %v885 = verf.f32.pop %v821
      %v886 = verf.f32.pop %v822
      %v887 = verf.f32.pop %v823
      %v888 = verf.f32.pop %v824
      %v889 = verf.f32.pop %v825
      %v890 = verf.f32.pop %v826
      %v891 = verf.f32.pop %v827
      %v892 = verf.f32.pop %v828
      %v893 = verf.f32.pop %v829
      %v894 = verf.f32.pop %v830
      %v895 = verf.f32.pop %v831
      %v896 = verf.f32.pop %v832
      %v897 = verf.f32.pop %v833
      %v898 = verf.f32.pop %v834
      %v899 = verf.f32.pop %v835
      %v900 = verf.f32.pop %v836
      %v901 = verf.f32.pop %v837
      %v902 = verf.f32.pop %v838
      %v903 = verf.f32.pop %v839
      %v904 = verf.f32.pop %v840
      %v905 = verf.f32.pop %v841
      %v906 = verf.f32.pop %v842
      %v907 = verf.f32.pop %v843
      %v908 = verf.f32.pop %v844
      %v909 = verf.f32.pop %v845
      %v910 = verf.f32.pop %v846
      %v911 = verf.f32.pop %v847
      %v912 = verf.f32.pop %v848
      %v913 = verf.f32.pop %v849
      %v914 = verf.f32.pop %v850
      %v915 = verf.f32.pop %v851
      %v916 = verf.f32.pop %v852
      %v917 = verf.f32.pop %v853
      %v918 = verf.f32.pop %v854
      %v919 = verf.f32.pop %v855
      %v920 = verf.f32.pop %v856
      %v921 = verf.f32.pop %v857
      %v922 = verf.f32.pop %v858
      %v923 = verf.f32.pop %v859
      %v924 = verf.f32.pop %v860
      %v925 = vadd.f32 %v861, 1.0
      %v926 = vadd.f32 %v862, 1.0
      %v927 = vadd.f32 %v863, 1.0
      %v928 = vadd.f32 %v864, 1.0
      %v929 = vadd.f32 %v865, 1.0
      %v930 = vadd.f32 %v866, 1.0
      %v931 = vadd.f32 %v867, 1.0
      %v932 = vadd.f32 %v868, 1.0
      %v933 = vadd.f32 %v869, 1.0
      %v934 = vadd.f32 %v870, 1.0
      %v935 = vadd.f32 %v871, 1.0
      %v936 = vadd.f32 %v872, 1.0
      %v937 = vadd.f32 %v873, 1.0
      %v938 = vadd.f32 %v874, 1.0
      %v939 = vadd.f32 %v875, 1.0
      %v940 = vadd.f32 %v876, 1.0
      %v941 = vadd.f32 %v877, 1.0
      %v942 = vadd.f32 %v878, 1.0
      %v943 = vadd.f32 %v879, 1.0
      %v944 = vadd.f32 %v880, 1.0
      %v945 = vadd.f32 %v881, 1.0
      %v946 = vadd.f32 %v882, 1.0
      %v947 = vadd.f32 %v883, 1.0
      %v948 = vadd.f32 %v884, 1.0
      %v949 = vadd.f32 %v885, 1.0
      %v950 = vadd.f32 %v886, 1.0
      %v951 = vadd.f32 %v887, 1.0
      %v952 = vadd.f32 %v888, 1.0
      %v953 = vadd.f32 %v889, 1.0
      %v954 = vadd.f32 %v890, 1.0
      %v955 = vadd.f32 %v891, 1.0
      %v956 = vadd.f32 %v892, 1.0
      %v957 = vadd.f32 %v893, 1.0
      %v958 = vadd.f32 %v894, 1.0
      %v959 = vadd.f32 %v895, 1.0
      %v960 = vadd.f32 %v896, 1.0
      %v961 = vadd.f32 %v897, 1.0
      %v962 = vadd.f32 %v898, 1.0
      %v963 = vadd.f32 %v899, 1.0
      %v964 = vadd.f32 %v900, 1.0
      %v965 = vadd.f32 %v901, 1.0
      %v966 = vadd.f32 %v902, 1.0
      %v967 = vadd.f32 %v903, 1.0
      %v968 = vadd.f32 %v904, 1.0
      %v969 = vadd.f32 %v905, 1.0
      %v970 = vadd.f32 %v906, 1.0
      %v971 = vadd.f32 %v907, 1.0
      %v972 = vadd.f32 %v908, 1.0
      %v973 = vadd.f32 %v909, 1.0
      %v974 = vadd.f32 %v910, 1.0
      %v975 = vadd.f32 %v911, 1.0
      %v976 = vadd.f32 %v912, 1.0
      %v977 = vadd.f32 %v913, 1.0
      %v978 = vadd.f32 %v914, 1.0
      %v979 = vadd.f32 %v915, 1.0
      %v980 = vadd.f32 %v916, 1.0
      %v981 = vadd.f32 %v917, 1.0
      %v982 = vadd.f32 %v918, 1.0
      %v983 = vadd.f32 %v919, 1.0
      %v984 = vadd.f32 %v920, 1.0
      %v985 = vadd.f32 %v921, 1.0
      %v986 = vadd.f32 %v922, 1.0
      %v987 = vadd.f32 %v923, 1.0
      %v988 = vadd.f32 %v924, 1.0
      %v989 = vmul.f32 %v733, %v925
      %v990 = vmul.f32 %v734, %v926
      %v991 = vmul.f32 %v735, %v927
      %v992 = vmul.f32 %v736, %v928
      %v993 = vmul.f32 %v737, %v929
      %v994 = vmul.f32 %v738, %v930
      %v995 = vmul.f32 %v739, %v931
      %v996 = vmul.f32 %v740, %v932
      %v997 = vmul.f32 %v741, %v933
      %v998 = vmul.f32 %v742, %v934
      %v999 = vmul.f32 %v743, %v935
      %v1000 = vmul.f32 %v744, %v936
      %v1001 = vmul.f32 %v745, %v937
      %v1002 = vmul.f32 %v746, %v938
      %v1003 = vmul.f32 %v747, %v939
      %v1004 = vmul.f32 %v748, %v940
      %v1005 = vmul.f32 %v749, %v941
      %v1006 = vmul.f32 %v750, %v942
      %v1007 = vmul.f32 %v751, %v943
      %v1008 = vmul.f32 %v752, %v944
      %v1009 = vmul.f32 %v753, %v945
      %v1010 = vmul.f32 %v754, %v946
      %v1011 = vmul.f32 %v755, %v947
      %v1012 = vmul.f32 %v756, %v948
      %v1013 = vmul.f32 %v757, %v949
      %v1014 = vmul.f32 %v758, %v950
      %v1015 = vmul.f32 %v759, %v951
      %v1016 = vmul.f32 %v760, %v952
      %v1017 = vmul.f32 %v761, %v953
      %v1018 = vmul.f32 %v762, %v954
      %v1019 = vmul.f32 %v763, %v955
      %v1020 = vmul.f32 %v764, %v956
      %v1021 = vmul.f32 %v765, %v957
      %v1022 = vmul.f32 %v766, %v958
      %v1023 = vmul.f32 %v767, %v959
      %v1024 = vmul.f32 %v768, %v960
      %v1025 = vmul.f32 %v769, %v961
      %v1026 = vmul.f32 %v770, %v962
      %v1027 = vmul.f32 %v771, %v963
      %v1028 = vmul.f32 %v772, %v964
      %v1029 = vmul.f32 %v773, %v965
      %v1030 = vmul.f32 %v774, %v966
      %v1031 = vmul.f32 %v775, %v967
      %v1032 = vmul.f32 %v776, %v968
      %v1033 = vmul.f32 %v777, %v969
      %v1034 = vmul.f32 %v778, %v970
      %v1035 = vmul.f32 %v779, %v971
      %v1036 = vmul.f32 %v780, %v972
      %v1037 = vmul.f32 %v781, %v973
      %v1038 = vmul.f32 %v782, %v974
      %v1039 = vmul.f32 %v783, %v975
      %v1040 = vmul.f32 %v784, %v976
      %v1041 = vmul.f32 %v785, %v977
      %v1042 = vmul.f32 %v786, %v978
      %v1043 = vmul.f32 %v787, %v979
      %v1044 = vmul.f32 %v788, %v980
      %v1045 = vmul.f32 %v789, %v981
      %v1046 = vmul.f32 %v790, %v982
      %v1047 = vmul.f32 %v791, %v983
      %v1048 = vmul.f32 %v792, %v984
      %v1049 = vmul.f32 %v793, %v985
      %v1050 = vmul.f32 %v794, %v986
      %v1051 = vmul.f32 %v795, %v987
      %v1052 = vmul.f32 %v796, %v988
      %v1053 = vpack.c.bf16 %v993, %v989
      %v1054 = vpack.c.bf16 %v994, %v990
      %v1055 = vpack.c.bf16 %v995, %v991
      %v1056 = vpack.c.bf16 %v996, %v992
      %v1057 = vpack.c.bf16 %v1001, %v997
      %v1058 = vpack.c.bf16 %v1002, %v998
      %v1059 = vpack.c.bf16 %v1003, %v999
      %v1060 = vpack.c.bf16 %v1004, %v1000
      %v1061 = vpack.c.bf16 %v1009, %v1005
      %v1062 = vpack.c.bf16 %v1010, %v1006
      %v1063 = vpack.c.bf16 %v1011, %v1007
      %v1064 = vpack.c.bf16 %v1012, %v1008
      %v1065 = vpack.c.bf16 %v1017, %v1013
      %v1066 = vpack.c.bf16 %v1018, %v1014
      %v1067 = vpack.c.bf16 %v1019, %v1015
      %v1068 = vpack.c.bf16 %v1020, %v1016
      %v1069 = vpack.c.bf16 %v1025, %v1021
      %v1070 = vpack.c.bf16 %v1026, %v1022
      %v1071 = vpack.c.bf16 %v1027, %v1023
      %v1072 = vpack.c.bf16 %v1028, %v1024
      %v1073 = vpack.c.bf16 %v1033, %v1029
      %v1074 = vpack.c.bf16 %v1034, %v1030
      %v1075 = vpack.c.bf16 %v1035, %v1031
      %v1076 = vpack.c.bf16 %v1036, %v1032
      %v1077 = vpack.c.bf16 %v1041, %v1037
      %v1078 = vpack.c.bf16 %v1042, %v1038
      %v1079 = vpack.c.bf16 %v1043, %v1039
      %v1080 = vpack.c.bf16 %v1044, %v1040
      %v1081 = vpack.c.bf16 %v1049, %v1045
      %v1082 = vpack.c.bf16 %v1050, %v1046
      %v1083 = vpack.c.bf16 %v1051, %v1047
      %v1084 = vpack.c.bf16 %v1052, %v1048
      %v1085 = vld [vmem:[%s3] sm:$0xf]
      %v1086 = vld [vmem:[%s3 + $0x4] sm:$0xf]
      %v1087 = vld [vmem:[%s3 + $0x8] sm:$0xf]
      %v1088 = vld [vmem:[%s3 + $0xc] sm:$0xf]
      %v1089 = vld [vmem:[%s3 + $0x10] sm:$0xf]
      %v1090 = vld [vmem:[%s3 + $0x14] sm:$0xf]
      %v1091 = vld [vmem:[%s3 + $0x18] sm:$0xf]
      %v1092 = vld [vmem:[%s3 + $0x1c] sm:$0xf]
      %v1093 = vld [vmem:[%s3 + $0x20] sm:$0xf]
      %v1094 = vld [vmem:[%s3 + $0x24] sm:$0xf]
      %v1095 = vld [vmem:[%s3 + $0x28] sm:$0xf]
      %v1096 = vld [vmem:[%s3 + $0x2c] sm:$0xf]
      %v1097 = vld [vmem:[%s3 + $0x30] sm:$0xf]
      %v1098 = vld [vmem:[%s3 + $0x34] sm:$0xf]
      %v1099 = vld [vmem:[%s3 + $0x38] sm:$0xf]
      %v1100 = vld [vmem:[%s3 + $0x3c] sm:$0xf]
      %v1101 = vld [vmem:[%s3 + $0x40] sm:$0xf]
      %v1102 = vld [vmem:[%s3 + $0x44] sm:$0xf]
      %v1103 = vld [vmem:[%s3 + $0x48] sm:$0xf]
      %v1104 = vld [vmem:[%s3 + $0x4c] sm:$0xf]
      %v1105 = vld [vmem:[%s3 + $0x50] sm:$0xf]
      %v1106 = vld [vmem:[%s3 + $0x54] sm:$0xf]
      %v1107 = vld [vmem:[%s3 + $0x58] sm:$0xf]
      %v1108 = vld [vmem:[%s3 + $0x5c] sm:$0xf]
      %v1109 = vld [vmem:[%s3 + $0x60] sm:$0xf]
      %v1110 = vld [vmem:[%s3 + $0x64] sm:$0xf]
      %v1111 = vld [vmem:[%s3 + $0x68] sm:$0xf]
      %v1112 = vld [vmem:[%s3 + $0x6c] sm:$0xf]
      %v1113 = vld [vmem:[%s3 + $0x70] sm:$0xf]
      %v1114 = vld [vmem:[%s3 + $0x74] sm:$0xf]
      %v1115 = vld [vmem:[%s3 + $0x78] sm:$0xf]
      %v1116 = vld [vmem:[%s3 + $0x7c] sm:$0xf]
      %v1117 = vld [vmem:[%s3 + $0x80] sm:$0xf]
      %v1118 = vld [vmem:[%s3 + $0x84] sm:$0xf]
      %v1119 = vld [vmem:[%s3 + $0x88] sm:$0xf]
      %v1120 = vld [vmem:[%s3 + $0x8c] sm:$0xf]
      %v1121 = vld [vmem:[%s3 + $0x90] sm:$0xf]
      %v1122 = vld [vmem:[%s3 + $0x94] sm:$0xf]
      %v1123 = vld [vmem:[%s3 + $0x98] sm:$0xf]
      %v1124 = vld [vmem:[%s3 + $0x9c] sm:$0xf]
      %v1125 = vld [vmem:[%s3 + $0xa0] sm:$0xf]
      %v1126 = vld [vmem:[%s3 + $0xa4] sm:$0xf]
      %v1127 = vld [vmem:[%s3 + $0xa8] sm:$0xf]
      %v1128 = vld [vmem:[%s3 + $0xac] sm:$0xf]
      %v1129 = vld [vmem:[%s3 + $0xb0] sm:$0xf]
      %v1130 = vld [vmem:[%s3 + $0xb4] sm:$0xf]
      %v1131 = vld [vmem:[%s3 + $0xb8] sm:$0xf]
      %v1132 = vld [vmem:[%s3 + $0xbc] sm:$0xf]
      %v1133 = vld [vmem:[%s3 + $0xc0] sm:$0xf]
      %v1134 = vld [vmem:[%s3 + $0xc4] sm:$0xf]
      %v1135 = vld [vmem:[%s3 + $0xc8] sm:$0xf]
      %v1136 = vld [vmem:[%s3 + $0xcc] sm:$0xf]
      %v1137 = vld [vmem:[%s3 + $0xd0] sm:$0xf]
      %v1138 = vld [vmem:[%s3 + $0xd4] sm:$0xf]
      %v1139 = vld [vmem:[%s3 + $0xd8] sm:$0xf]
      %v1140 = vld [vmem:[%s3 + $0xdc] sm:$0xf]
      %v1141 = vld [vmem:[%s3 + $0xe0] sm:$0xf]
      %v1142 = vld [vmem:[%s3 + $0xe4] sm:$0xf]
      %v1143 = vld [vmem:[%s3 + $0xe8] sm:$0xf]
      %v1144 = vld [vmem:[%s3 + $0xec] sm:$0xf]
      %v1145 = vld [vmem:[%s3 + $0xf0] sm:$0xf]
      %v1146 = vld [vmem:[%s3 + $0xf4] sm:$0xf]
      %v1147 = vld [vmem:[%s3 + $0xf8] sm:$0xf]
      %v1148 = vld [vmem:[%s3 + $0xfc] sm:$0xf]
      %v1149 = vld [vmem:[%s4] sm:$0x1]
      %v1151 = vlaneseq
      %v1152 = vshrl.u32 %v1151, 7
      %v1153 = vsub.s32 0, %v1152
      %v1154 = vrot.slane %v1149, %v1153
      %v1220 = vunpack.c.l.b16 %v1085
      %v1221 = vunpack.c.l.b16 %v1086
      %v1222 = vunpack.c.l.b16 %v1087
      %v1223 = vunpack.c.l.b16 %v1088
      %v1224 = vunpack.c.l.b16 %v1089
      %v1225 = vunpack.c.l.b16 %v1090
      %v1226 = vunpack.c.l.b16 %v1091
      %v1227 = vunpack.c.l.b16 %v1092
      %v1228 = vunpack.c.l.b16 %v1093
      %v1229 = vunpack.c.l.b16 %v1094
      %v1230 = vunpack.c.l.b16 %v1095
      %v1231 = vunpack.c.l.b16 %v1096
      %v1232 = vunpack.c.l.b16 %v1097
      %v1233 = vunpack.c.l.b16 %v1098
      %v1234 = vunpack.c.l.b16 %v1099
      %v1235 = vunpack.c.l.b16 %v1100
      %v1236 = vunpack.c.l.b16 %v1101
      %v1237 = vunpack.c.l.b16 %v1102
      %v1238 = vunpack.c.l.b16 %v1103
      %v1239 = vunpack.c.l.b16 %v1104
      %v1240 = vunpack.c.l.b16 %v1105
      %v1241 = vunpack.c.l.b16 %v1106
      %v1242 = vunpack.c.l.b16 %v1107
      %v1243 = vunpack.c.l.b16 %v1108
      %v1244 = vunpack.c.l.b16 %v1109
      %v1245 = vunpack.c.l.b16 %v1110
      %v1246 = vunpack.c.l.b16 %v1111
      %v1247 = vunpack.c.l.b16 %v1112
      %v1248 = vunpack.c.l.b16 %v1113
      %v1249 = vunpack.c.l.b16 %v1114
      %v1250 = vunpack.c.l.b16 %v1115
      %v1251 = vunpack.c.l.b16 %v1116
      %v1252 = vunpack.c.l.b16 %v1117
      %v1253 = vunpack.c.l.b16 %v1118
      %v1254 = vunpack.c.l.b16 %v1119
      %v1255 = vunpack.c.l.b16 %v1120
      %v1256 = vunpack.c.l.b16 %v1121
      %v1257 = vunpack.c.l.b16 %v1122
      %v1258 = vunpack.c.l.b16 %v1123
      %v1259 = vunpack.c.l.b16 %v1124
      %v1260 = vunpack.c.l.b16 %v1125
      %v1261 = vunpack.c.l.b16 %v1126
      %v1262 = vunpack.c.l.b16 %v1127
      %v1263 = vunpack.c.l.b16 %v1128
      %v1264 = vunpack.c.l.b16 %v1129
      %v1265 = vunpack.c.l.b16 %v1130
      %v1266 = vunpack.c.l.b16 %v1131
      %v1267 = vunpack.c.l.b16 %v1132
      %v1268 = vunpack.c.l.b16 %v1133
      %v1269 = vunpack.c.l.b16 %v1134
      %v1270 = vunpack.c.l.b16 %v1135
      %v1271 = vunpack.c.l.b16 %v1136
      %v1272 = vunpack.c.l.b16 %v1137
      %v1273 = vunpack.c.l.b16 %v1138
      %v1274 = vunpack.c.l.b16 %v1139
      %v1275 = vunpack.c.l.b16 %v1140
      %v1276 = vunpack.c.l.b16 %v1141
      %v1277 = vunpack.c.l.b16 %v1142
      %v1278 = vunpack.c.l.b16 %v1143
      %v1279 = vunpack.c.l.b16 %v1144
      %v1280 = vunpack.c.l.b16 %v1145
      %v1281 = vunpack.c.l.b16 %v1146
      %v1282 = vunpack.c.l.b16 %v1147
      %v1283 = vunpack.c.l.b16 %v1148
      %v1284 = vpack.c.b16 %v1221, %v1220
      %v1285 = vpack.c.b16 %v1223, %v1222
      %v1286 = vpack.c.b16 %v1225, %v1224
      %v1287 = vpack.c.b16 %v1227, %v1226
      %v1288 = vpack.c.b16 %v1229, %v1228
      %v1289 = vpack.c.b16 %v1231, %v1230
      %v1290 = vpack.c.b16 %v1233, %v1232
      %v1291 = vpack.c.b16 %v1235, %v1234
      %v1292 = vpack.c.b16 %v1237, %v1236
      %v1293 = vpack.c.b16 %v1239, %v1238
      %v1294 = vpack.c.b16 %v1241, %v1240
      %v1295 = vpack.c.b16 %v1243, %v1242
      %v1296 = vpack.c.b16 %v1245, %v1244
      %v1297 = vpack.c.b16 %v1247, %v1246
      %v1298 = vpack.c.b16 %v1249, %v1248
      %v1299 = vpack.c.b16 %v1251, %v1250
      %v1300 = vpack.c.b16 %v1253, %v1252
      %v1301 = vpack.c.b16 %v1255, %v1254
      %v1302 = vpack.c.b16 %v1257, %v1256
      %v1303 = vpack.c.b16 %v1259, %v1258
      %v1304 = vpack.c.b16 %v1261, %v1260
      %v1305 = vpack.c.b16 %v1263, %v1262
      %v1306 = vpack.c.b16 %v1265, %v1264
      %v1307 = vpack.c.b16 %v1267, %v1266
      %v1308 = vpack.c.b16 %v1269, %v1268
      %v1309 = vpack.c.b16 %v1271, %v1270
      %v1310 = vpack.c.b16 %v1273, %v1272
      %v1311 = vpack.c.b16 %v1275, %v1274
      %v1312 = vpack.c.b16 %v1277, %v1276
      %v1313 = vpack.c.b16 %v1279, %v1278
      %v1314 = vpack.c.b16 %v1281, %v1280
      %v1315 = vpack.c.b16 %v1283, %v1282
      %1348 = vmatprep.subr.bf16.mxu0 0
      %1349 = vmatpush1.bf16.msra.mxu0 %v1291
      %1350 = vmatprep.subr.bf16.mxu0 0
      %1351 = vmatpush1.bf16.msra.mxu0 %v1290
      %1352 = vmatprep.subr.bf16.mxu0 0
      %1353 = vmatpush1.bf16.msra.mxu0 %v1289
      %1354 = vmatprep.subr.bf16.mxu0 0
      %1355 = vmatpush1.bf16.msra.mxu0 %v1288
      %1356 = vmatprep.subr.bf16.mxu0 0
      %1357 = vmatpush1.bf16.msra.mxu0 %v1287
      %1358 = vmatprep.subr.bf16.mxu0 0
      %1359 = vmatpush1.bf16.msra.mxu0 %v1286
      %1360 = vmatprep.subr.bf16.mxu0 0
      %1361 = vmatpush1.bf16.msra.mxu0 %v1285
      %1362 = vmatprep.subr.bf16.mxu0 0
      %1363 = vmatpush1.bf16.msra.mxu0 %v1284
      %1364 = vmatprep.subr.bf16.mxu0 0
      %1365 = vmatpush2.bf16.msra.mxu0 %v1299
      %1366 = vmatprep.subr.bf16.mxu0 0
      %1367 = vmatpush2.bf16.msra.mxu0 %v1298
      %1368 = vmatprep.subr.bf16.mxu0 0
      %1369 = vmatpush2.bf16.msra.mxu0 %v1297
      %1370 = vmatprep.subr.bf16.mxu0 0
      %1371 = vmatpush2.bf16.msra.mxu0 %v1296
      %1372 = vmatprep.subr.bf16.mxu0 0
      %1373 = vmatpush2.bf16.msra.mxu0 %v1295
      %1374 = vmatprep.subr.bf16.mxu0 0
      %1375 = vmatpush2.bf16.msra.mxu0 %v1294
      %1376 = vmatprep.subr.bf16.mxu0 0
      %1377 = vmatpush2.bf16.msra.mxu0 %v1293
      %1378 = vmatprep.subr.bf16.mxu0 0
      %1379 = vmatpush2.bf16.msra.mxu0 %v1292
      %1380 = vmatprep.mubr.bf16.mxu0 %v1054
      %1381 = vmatmul.mubr.bf16.gmra.mxu0 %v1053
      %v1382 = vpop.f32.mrf.mxu0
      %v1383 = vadd.f32 %v1154, %v1382
      %v1384 = vpop.f32.mrf.mxu0
      %v1385 = vpop.f32.mrf.mxu0
      %v1386 = vadd.f32 %v1154, %v1385
      %v1387 = vpop.f32.mrf.mxu0
      %1388 = vmatprep.mubr.bf16.mxu0 %v1058
      %1389 = vmatmul.mubr.bf16.gmra.mxu0 %v1057
      %v1390 = vpop.f32.mrf.mxu0
      %v1391 = vadd.f32 %v1154, %v1390
      %v1392 = vpop.f32.mrf.mxu0
      %v1393 = vpop.f32.mrf.mxu0
      %v1394 = vadd.f32 %v1154, %v1393
      %v1395 = vpop.f32.mrf.mxu0
      %1396 = vmatprep.mubr.bf16.mxu0 %v1062
      %1397 = vmatmul.mubr.bf16.gmra.mxu0 %v1061
      %v1398 = vpop.f32.mrf.mxu0
      %v1399 = vadd.f32 %v1154, %v1398
      %v1400 = vpop.f32.mrf.mxu0
      %v1401 = vpop.f32.mrf.mxu0
      %v1402 = vadd.f32 %v1154, %v1401
      %v1403 = vpop.f32.mrf.mxu0
      %1404 = vmatprep.mubr.bf16.mxu0 %v1066
      %1405 = vmatmul.mubr.bf16.gmra.mxu0 %v1065
      %v1406 = vpop.f32.mrf.mxu0
      %v1407 = vadd.f32 %v1154, %v1406
      %v1408 = vpop.f32.mrf.mxu0
      %v1409 = vpop.f32.mrf.mxu0
      %v1410 = vadd.f32 %v1154, %v1409
      %v1411 = vpop.f32.mrf.mxu0
      %1412 = vmatprep.mubr.bf16.mxu0 %v1070
      %1413 = vmatmul.mubr.bf16.gmra.mxu0 %v1069
      %v1414 = vpop.f32.mrf.mxu0
      %v1415 = vadd.f32 %v1154, %v1414
      %v1416 = vpop.f32.mrf.mxu0
      %v1417 = vpop.f32.mrf.mxu0
      %v1418 = vadd.f32 %v1154, %v1417
      %v1419 = vpop.f32.mrf.mxu0
      %1420 = vmatprep.mubr.bf16.mxu0 %v1074
      %1421 = vmatmul.mubr.bf16.gmra.mxu0 %v1073
      %v1422 = vpop.f32.mrf.mxu0
      %v1423 = vadd.f32 %v1154, %v1422
      %v1424 = vpop.f32.mrf.mxu0
      %v1425 = vpop.f32.mrf.mxu0
      %v1426 = vadd.f32 %v1154, %v1425
      %v1427 = vpop.f32.mrf.mxu0
      %1428 = vmatprep.mubr.bf16.mxu0 %v1078
      %1429 = vmatmul.mubr.bf16.gmra.mxu0 %v1077
      %v1430 = vpop.f32.mrf.mxu0
      %v1431 = vadd.f32 %v1154, %v1430
      %v1432 = vpop.f32.mrf.mxu0
      %v1433 = vpop.f32.mrf.mxu0
      %v1434 = vadd.f32 %v1154, %v1433
      %v1435 = vpop.f32.mrf.mxu0
      %1436 = vmatprep.mubr.bf16.mxu0 %v1082
      %1437 = vmatmul.mubr.bf16.gmra.mxu0 %v1081
      %v1438 = vpop.f32.mrf.mxu0
      %v1439 = vadd.f32 %v1154, %v1438
      %v1440 = vpop.f32.mrf.mxu0
      %v1441 = vpop.f32.mrf.mxu0
      %v1442 = vadd.f32 %v1154, %v1441
      %v1443 = vpop.f32.mrf.mxu0
      %1444 = vdwg.mxu0
      %1445 = vmatprep.subr.bf16.mxu0 0
      %1446 = vmatpush1.bf16.msra.mxu0 %v1307
      %1447 = vmatprep.subr.bf16.mxu0 0
      %1448 = vmatpush1.bf16.msra.mxu0 %v1306
      %1449 = vmatprep.subr.bf16.mxu0 0
      %1450 = vmatpush1.bf16.msra.mxu0 %v1305
      %1451 = vmatprep.subr.bf16.mxu0 0
      %1452 = vmatpush1.bf16.msra.mxu0 %v1304
      %1453 = vmatprep.subr.bf16.mxu0 0
      %1454 = vmatpush1.bf16.msra.mxu0 %v1303
      %1455 = vmatprep.subr.bf16.mxu0 0
      %1456 = vmatpush1.bf16.msra.mxu0 %v1302
      %1457 = vmatprep.subr.bf16.mxu0 0
      %1458 = vmatpush1.bf16.msra.mxu0 %v1301
      %1459 = vmatprep.subr.bf16.mxu0 0
      %1460 = vmatpush1.bf16.msra.mxu0 %v1300
      %1461 = vmatprep.subr.bf16.mxu0 0
      %1462 = vmatpush2.bf16.msra.mxu0 %v1315
      %1463 = vmatprep.subr.bf16.mxu0 0
      %1464 = vmatpush2.bf16.msra.mxu0 %v1314
      %1465 = vmatprep.subr.bf16.mxu0 0
      %1466 = vmatpush2.bf16.msra.mxu0 %v1313
      %1467 = vmatprep.subr.bf16.mxu0 0
      %1468 = vmatpush2.bf16.msra.mxu0 %v1312
      %1469 = vmatprep.subr.bf16.mxu0 0
      %1470 = vmatpush2.bf16.msra.mxu0 %v1311
      %1471 = vmatprep.subr.bf16.mxu0 0
      %1472 = vmatpush2.bf16.msra.mxu0 %v1310
      %1473 = vmatprep.subr.bf16.mxu0 0
      %1474 = vmatpush2.bf16.msra.mxu0 %v1309
      %1475 = vmatprep.subr.bf16.mxu0 0
      %1476 = vmatpush2.bf16.msra.mxu0 %v1308
      %1477 = vmatprep.mubr.bf16.mxu0 %v1056
      %1478 = vmatmul.mubr.bf16.gmra.mxu0 %v1055
      %v1479 = vpop.f32.mrf.mxu0
      %v1480 = vadd.f32 %v1383, %v1479
      %v1481 = vpop.f32.mrf.mxu0
      %v1482 = vpop.f32.mrf.mxu0
      %v1483 = vadd.f32 %v1386, %v1482
      %v1484 = vpop.f32.mrf.mxu0
      %1485 = vmatprep.mubr.bf16.mxu0 %v1060
      %1486 = vmatmul.mubr.bf16.gmra.mxu0 %v1059
      %v1487 = vpop.f32.mrf.mxu0
      %v1488 = vadd.f32 %v1391, %v1487
      %v1489 = vpop.f32.mrf.mxu0
      %v1490 = vpop.f32.mrf.mxu0
      %v1491 = vadd.f32 %v1394, %v1490
      %v1492 = vpop.f32.mrf.mxu0
      %1493 = vmatprep.mubr.bf16.mxu0 %v1064
      %1494 = vmatmul.mubr.bf16.gmra.mxu0 %v1063
      %v1495 = vpop.f32.mrf.mxu0
      %v1496 = vadd.f32 %v1399, %v1495
      %v1497 = vpop.f32.mrf.mxu0
      %v1498 = vpop.f32.mrf.mxu0
      %v1499 = vadd.f32 %v1402, %v1498
      %v1500 = vpop.f32.mrf.mxu0
      %1501 = vmatprep.mubr.bf16.mxu0 %v1068
      %1502 = vmatmul.mubr.bf16.gmra.mxu0 %v1067
      %v1503 = vpop.f32.mrf.mxu0
      %v1504 = vadd.f32 %v1407, %v1503
      %v1505 = vpop.f32.mrf.mxu0
      %v1506 = vpop.f32.mrf.mxu0
      %v1507 = vadd.f32 %v1410, %v1506
      %v1508 = vpop.f32.mrf.mxu0
      %1509 = vmatprep.mubr.bf16.mxu0 %v1072
      %1510 = vmatmul.mubr.bf16.gmra.mxu0 %v1071
      %v1511 = vpop.f32.mrf.mxu0
      %v1512 = vadd.f32 %v1415, %v1511
      %v1513 = vpop.f32.mrf.mxu0
      %v1514 = vpop.f32.mrf.mxu0
      %v1515 = vadd.f32 %v1418, %v1514
      %v1516 = vpop.f32.mrf.mxu0
      %1517 = vmatprep.mubr.bf16.mxu0 %v1076
      %1518 = vmatmul.mubr.bf16.gmra.mxu0 %v1075
      %v1519 = vpop.f32.mrf.mxu0
      %v1520 = vadd.f32 %v1423, %v1519
      %v1521 = vpop.f32.mrf.mxu0
      %v1522 = vpop.f32.mrf.mxu0
      %v1523 = vadd.f32 %v1426, %v1522
      %v1524 = vpop.f32.mrf.mxu0
      %1525 = vmatprep.mubr.bf16.mxu0 %v1080
      %1526 = vmatmul.mubr.bf16.gmra.mxu0 %v1079
      %v1527 = vpop.f32.mrf.mxu0
      %v1528 = vadd.f32 %v1431, %v1527
      %v1529 = vpop.f32.mrf.mxu0
      %v1530 = vpop.f32.mrf.mxu0
      %v1531 = vadd.f32 %v1434, %v1530
      %v1532 = vpop.f32.mrf.mxu0
      %1533 = vmatprep.mubr.bf16.mxu0 %v1084
      %1534 = vmatmul.mubr.bf16.gmra.mxu0 %v1083
      %v1535 = vpop.f32.mrf.mxu0
      %v1536 = vadd.f32 %v1439, %v1535
      %v1537 = vpop.f32.mrf.mxu0
      %v1538 = vpop.f32.mrf.mxu0
      %v1539 = vadd.f32 %v1442, %v1538
      %v1540 = vpop.f32.mrf.mxu0
      %1541 = vdwg.mxu0
      %1542 = vst [vmem:[%s226] sm:$0xff] %v1480
      %1543 = vst [vmem:[%s226 + $0x8] sm:$0xff] %v1483
      %1544 = vst [vmem:[%s226 + $0x10] sm:$0xff] %v1488
      %1545 = vst [vmem:[%s226 + $0x18] sm:$0xff] %v1491
      %1546 = vst [vmem:[%s226 + $0x20] sm:$0xff] %v1496
      %1547 = vst [vmem:[%s226 + $0x28] sm:$0xff] %v1499
      %1548 = vst [vmem:[%s226 + $0x30] sm:$0xff] %v1504
      %1549 = vst [vmem:[%s226 + $0x38] sm:$0xff] %v1507
      %1550 = vst [vmem:[%s226 + $0x40] sm:$0xff] %v1512
      %1551 = vst [vmem:[%s226 + $0x48] sm:$0xff] %v1515
      %1552 = vst [vmem:[%s226 + $0x50] sm:$0xff] %v1520
      %1553 = vst [vmem:[%s226 + $0x58] sm:$0xff] %v1523
      %1554 = vst [vmem:[%s226 + $0x60] sm:$0xff] %v1528
      %1555 = vst [vmem:[%s226 + $0x68] sm:$0xff] %v1531
      %1556 = vst [vmem:[%s226 + $0x70] sm:$0xff] %v1536
      %1557 = vst [vmem:[%s226 + $0x78] sm:$0xff] %v1539
      %s1558 = smul.u32 16, %s16
      %p1559 = scmp.lt.s32.totalorder %s1558, 31
      %s1560 = scalar_select %p1559, %s1558, 31
      %s1561 = smul.addr %s1560, 8
      %s1562 = scalar_lea.vmem %s5, %s1561
      // Predicated region
      $region41: #{_fc_block_forward_impl.1} parent=39 // pred_check
        %p1563 = pneg %p144
      $region42: #{_fc_block_forward_impl.1} parent=39 // pred_check_branch
        %1565 = sbr.rel (%p1563) target = $region44
      $region43: #{_fc_block_forward_impl.1} parent=39 // pred_region
        %s1566 = smul.u32 16, %s16
      $region44: #{_fc_block_forward_impl.1} parent=39 // pred_fallthru
        _
    $region40: #{_fc_block_forward_impl.1} parent=5 // pred_fallthru
      _
    %p1567 = scmp.le.s32.totalorder 2, %s11
    // Predicated region
    $region45: #{_fc_block_forward_impl.1} parent=5 // pred_check
      %p1568 = pneg %p1567
    $region46: #{_fc_block_forward_impl.1} parent=5 // pred_check_branch
      %1570 = sbr.rel (%p1568) target = $region48
    $region47: #{_fc_block_forward_impl.1} parent=5 // pred_region
      %s1571 = ssub.s32 %s11, 2
      // Predicated region
      $region49: #{_fc_block_forward_impl.1} parent=47 // pred_check
        %p1572 = pneg %p150
      $region50: #{_fc_block_forward_impl.1} parent=47 // pred_check_branch
        %1574 = sbr.rel (%p1572) target = $region52
      $region51: #{_fc_block_forward_impl.1} parent=47 // pred_region
        %s1575 = smul.u32 16, %s17
        %p1576 = scmp.lt.s32.totalorder %s1575, 31
        %s1577 = scalar_select %p1576, %s1575, 31
        %s1578 = smul.addr %s1577, 8
        %s1579 = scalar_lea.vmem %s5, %s1578
      $region52: #{_fc_block_forward_impl.1} parent=47 // pred_fallthru
        _
    $region48: #{_fc_block_forward_impl.1} parent=5 // pred_fallthru
      _
  $region6: #{_fc_block_forward_impl.1} parent=0 // loop_footer
    %s15 = sadd.s32 1, %s11
  $region7: #{_fc_block_forward_impl.1} parent=0 // loop_footer_branch
    %10 = sbr.rel target = $region3
  $region8: #{_fc_block_forward_impl.1} parent=0 // loop_exit
    _

</llo_original>
